<compile_context>
chip_gen: v5e
topology: v5e:2x2
jax: 0.10.0
libtpu: 0.0.40
codegen_flags: <defaults>
</compile_context>

<pallas_src>
import functools

import jax
import jax.numpy as jnp
from jax.experimental import pallas as pl
from jax.experimental.pallas import tpu as pltpu


def gcn_combiner_kernel(x_ref, wp0_ref, bp0_ref, adjT_ref, alpha_ref,
                        wc1t_ref, bc1_ref, wqt_ref, bq_ref, wkt_ref, bk_ref,
                        g_ref, b_ref, mu_ref, var_ref, wp1_ref, bp1_ref,
                        o_ref, *, eps=1e-5):
    # Block shapes:
    #   x_ref   : (Bb, T, C)   concatenated & "pre-transposed" features (C on lanes)
    #   wp0     : (J, T)       param_pool0.weight
    #   bp0     : (J, 1)       param_pool0.bias
    #   adjT    : (J, J)       adj1.T (so the A1 matmul needs no in-kernel transpose)
    #   alpha   : (1, 1)
    #   wc1t    : (C, C)       conv1.weight.squeeze(-1).T
    #   bc1     : (1, C)
    #   wqt/wkt : (C, Cq)      conv_q1/conv_k1 weight transposed
    #   bq/bk   : (1, Cq)
    #   g,b,mu,var : (1, C)    BatchNorm1d affine + running stats
    #   wp1     : (1, J)       param_pool1.weight
    #   bp1     : (1, 1)       param_pool1.bias
    #   o_ref   : (Bb, 1, C)
    wp0 = wp0_ref[...]
    bp0 = bp0_ref[...]
    adjT = adjT_ref[...]
    alpha = alpha_ref[...]                     # (1,1): kept 2-D, broadcasts over (J,J)
    wc1t = wc1t_ref[...]
    bc1 = bc1_ref[...]
    wqt = wqt_ref[...]
    bq = bq_ref[...]
    wkt = wkt_ref[...]
    bk = bk_ref[...]
    bn_mu = mu_ref[...]
    bn_scale = g_ref[...] * jax.lax.rsqrt(var_ref[...] + eps)   # (1, C)
    bn_shift = b_ref[...]
    wp1 = wp1_ref[...]
    bp1 = bp1_ref[...]

    Bb = x_ref.shape[0]
    for b in range(Bb):                        # static unroll; Bb is small (default 1)
        x_b = x_ref[b]                         # (T, C)

        # param_pool0 on the transposed features, kept in (J, C) layout:
        #   pooled[j, c] == (hs.transpose(1,2) @ W0^T)[b, c, j]
        pooled = jnp.dot(wp0, x_b, preferred_element_type=jnp.float32) + bp0   # (J, C)

        # conv_q1 / conv_k1 (1x1 conv == channel mixing) then mean over out-channels.
        qf = jnp.dot(pooled, wqt, preferred_element_type=jnp.float32) + bq     # (J, Cq)
        kf = jnp.dot(pooled, wkt, preferred_element_type=jnp.float32) + bk     # (J, Cq)
        q1 = jnp.mean(qf, axis=1, keepdims=True)                               # (J, 1)
        k1 = jnp.mean(kf, axis=1, keepdims=True)                               # (J, 1)

        # A1^T[j, i] = adj1[i, j] + alpha * tanh(q1[i] - k1[j])
        a1t = adjT + jnp.tanh(jnp.transpose(q1) - k1) * alpha                  # (J, J)

        # conv1 (1x1), then hs @ A1 expressed in (J, C) layout as A1^T @ hs1.
        hs1 = jnp.dot(pooled, wc1t, preferred_element_type=jnp.float32) + bc1  # (J, C)
        hs2 = jnp.dot(a1t, hs1, preferred_element_type=jnp.float32)            # (J, C)

        # BatchNorm1d over the channel (lane) axis, eval mode.
        hs3 = (hs2 - bn_mu) * bn_scale + bn_shift                              # (J, C)

        # param_pool1: Linear(J -> 1), dropout = identity, flatten(1).
        row = jnp.dot(wp1, hs3, preferred_element_type=jnp.float32) + bp1      # (1, C)
        o_ref[b] = row.astype(o_ref.dtype)


def gcn_combiner_forward(features, params, *, batch_block=1, eps=1e-5):
    """features: dict name -> (B, S_i, C); names containing 'FPN1_' are skipped."""
    names = [n for n in features if "FPN1_" not in n]
    hs = jnp.concatenate([features[n] for n in names], axis=1)      # (B, T, C)
    B, T, C = hs.shape
    wp0 = params["w_pool0"]
    J = wp0.shape[0]
    Cq = params["w_q"].shape[0]
    assert B % batch_block == 0, "batch_block must divide the batch size"

    # Prepare parameters in kernel-friendly (transposed / 2-D) layouts.
    bp0 = params["b_pool0"].reshape(J, 1)
    adjT = params["adj1"].T
    alpha = params["alpha1"].reshape(1, 1)
    wc1t = params["w_conv1"].T                                      # (C, C)
    bc1 = params["b_conv1"].reshape(1, C)
    wqt = params["w_q"].T                                           # (C, Cq)
    bq = params["b_q"].reshape(1, Cq)
    wkt = params["w_k"].T                                           # (C, Cq)
    bk = params["b_k"].reshape(1, Cq)
    g = params["bn_gamma"].reshape(1, C)
    be = params["bn_beta"].reshape(1, C)
    mu = params["bn_mean"].reshape(1, C)
    var = params["bn_var"].reshape(1, C)
    wp1 = params["w_pool1"].reshape(1, J)
    bp1 = params["b_pool1"].reshape(1, 1)

    const = lambda shape: pl.BlockSpec(shape, lambda b: (0, 0))     # grid-invariant params

    out = pl.pallas_call(
        functools.partial(gcn_combiner_kernel, eps=eps),
        out_shape=jax.ShapeDtypeStruct((B, 1, C), hs.dtype),
        grid_spec=pltpu.PrefetchScalarGridSpec(
            num_scalar_prefetch=0,
            grid=(B // batch_block,),
            in_specs=[
                pl.BlockSpec((batch_block, T, C), lambda b: (b, 0, 0)),
                const((J, T)),    # w_pool0
                const((J, 1)),    # b_pool0
                const((J, J)),    # adj1^T
                const((1, 1)),    # alpha1
                const((C, C)),    # conv1 weight^T
                const((1, C)),    # conv1 bias
                const((C, Cq)),   # conv_q1 weight^T
                const((1, Cq)),   # conv_q1 bias
                const((C, Cq)),   # conv_k1 weight^T
                const((1, Cq)),   # conv_k1 bias
                const((1, C)),    # bn gamma
                const((1, C)),    # bn beta
                const((1, C)),    # bn running mean
                const((1, C)),    # bn running var
                const((1, J)),    # param_pool1 weight
                const((1, 1)),    # param_pool1 bias
            ],
            out_specs=pl.BlockSpec((batch_block, 1, C), lambda b: (b, 0, 0)),
        ),
        compiler_params=pltpu.CompilerParams(dimension_semantics=("parallel",)),
    )(hs, wp0, bp0, adjT, alpha, wc1t, bc1, wqt, bq, wkt, bk, g, be, mu, var, wp1, bp1)

    return out.reshape(B, C)


def gcn_combiner_reference(features, p, eps=1e-5):
    """Pure-JAX mirror of the PyTorch forward (eval-mode BN, identity dropout)."""
    hs = jnp.concatenate([features[n] for n in features if "FPN1_" not in n], axis=1)
    hs = jnp.swapaxes(hs, 1, 2)                                            # (B, C, T)
    hs = jnp.einsum("bct,jt->bcj", hs, p["w_pool0"]) + p["b_pool0"][None, None, :]
    q1 = jnp.einsum("bcj,oc->boj", hs, p["w_q"]) + p["b_q"][None, :, None]
    q1 = jnp.mean(q1, axis=1)                                              # (B, J)
    k1 = jnp.einsum("bcj,oc->boj", hs, p["w_k"]) + p["b_k"][None, :, None]
    k1 = jnp.mean(k1, axis=1)                                              # (B, J)
    A1 = jnp.tanh(q1[:, :, None] - k1[:, None, :])
    A1 = p["adj1"][None] + A1 * p["alpha1"]
    hs = jnp.einsum("bcj,oc->boj", hs, p["w_conv1"]) + p["b_conv1"][None, :, None]
    hs = jnp.einsum("bcj,bjk->bck", hs, A1)
    hs = (hs - p["bn_mean"][None, :, None]) / jnp.sqrt(p["bn_var"][None, :, None] + eps) \
         * p["bn_gamma"][None, :, None] + p["bn_beta"][None, :, None]
    hs = jnp.einsum("bcj,j->bc", hs, p["w_pool1"][0]) + p["b_pool1"][0]
    return hs


if __name__ == "__main__":
    B, C = 2, 64                    # batch, proj_size (fpn_size)
    Cq = C // 4
    T1, T2 = 160, 96
    T = T1 + T2                     # total_num_selects = 256
    J = T // 64                     # num_joints = 4

    key = jax.random.PRNGKey(0)
    ks = jax.random.split(key, 17)

    features = {
        "layer1": jax.random.normal(ks[0], (B, T1, C), jnp.float32),
        "layer2": jax.random.normal(ks[1], (B, T2, C), jnp.float32),
        "FPN1_layer1": jax.random.normal(ks[2], (B, T1, C), jnp.float32),  # skipped
    }
    params = {
        "w_pool0": jax.random.normal(ks[3], (J, T), jnp.float32) / T ** 0.5,
        "b_pool0": 0.1 * jax.random.normal(ks[4], (J,), jnp.float32),
        "adj1": (jnp.eye(J, dtype=jnp.float32) / 100.0 + 1.0 / 100.0
                 + 0.01 * jax.random.normal(ks[5], (J, J), jnp.float32)),
        "alpha1": jnp.full((1,), 0.3, jnp.float32),
        "w_conv1": jax.random.normal(ks[6], (C, C), jnp.float32) / C ** 0.5,
        "b_conv1": 0.1 * jax.random.normal(ks[7], (C,), jnp.float32),
        "w_q": jax.random.normal(ks[8], (Cq, C), jnp.float32) / C ** 0.5,
        "b_q": 0.1 * jax.random.normal(ks[9], (Cq,), jnp.float32),
        "w_k": jax.random.normal(ks[10], (Cq, C), jnp.float32) / C ** 0.5,
        "b_k": 0.1 * jax.random.normal(ks[11], (Cq,), jnp.float32),
        "bn_gamma": 1.0 + 0.1 * jax.random.normal(ks[12], (C,), jnp.float32),
        "bn_beta": 0.1 * jax.random.normal(ks[13], (C,), jnp.float32),
        "bn_mean": 0.1 * jax.random.normal(ks[14], (C,), jnp.float32),
        "bn_var": 1.0 + 0.5 * jnp.abs(jax.random.normal(ks[15], (C,), jnp.float32)),
        "w_pool1": jax.random.normal(ks[16], (1, J), jnp.float32) / J ** 0.5,
        "b_pool1": jnp.zeros((1,), jnp.float32),
    }

    out = jax.block_until_ready(gcn_combiner_forward(features, params))
    ref = jax.block_until_ready(gcn_combiner_reference(features, params))

    assert out.shape == (B, C)
    assert jnp.allclose(out, ref, rtol=1e-4, atol=1e-4), "Pallas output mismatch vs reference"

    print("KERNEL_OK")
</pallas_src>

<mosaic_0001>
module attributes {stable_mosaic.version = 11 : i64} {
  func.func @gcn_combiner_kernel(%arg0: i32, %arg1: memref<1x256x64xf32, #tpu.memory_space<vmem>>, %arg2: memref<4x256xf32, #tpu.memory_space<vmem>>, %arg3: memref<4x1xf32, #tpu.memory_space<vmem>>, %arg4: memref<4x4xf32, #tpu.memory_space<vmem>>, %arg5: memref<1x1xf32, #tpu.memory_space<vmem>>, %arg6: memref<64x64xf32, #tpu.memory_space<vmem>>, %arg7: memref<1x64xf32, #tpu.memory_space<vmem>>, %arg8: memref<64x16xf32, #tpu.memory_space<vmem>>, %arg9: memref<1x16xf32, #tpu.memory_space<vmem>>, %arg10: memref<64x16xf32, #tpu.memory_space<vmem>>, %arg11: memref<1x16xf32, #tpu.memory_space<vmem>>, %arg12: memref<1x64xf32, #tpu.memory_space<vmem>>, %arg13: memref<1x64xf32, #tpu.memory_space<vmem>>, %arg14: memref<1x64xf32, #tpu.memory_space<vmem>>, %arg15: memref<1x64xf32, #tpu.memory_space<vmem>>, %arg16: memref<1x4xf32, #tpu.memory_space<vmem>>, %arg17: memref<1x1xf32, #tpu.memory_space<vmem>>, %arg18: memref<1x1x64xf32, #tpu.memory_space<vmem>>) attributes {dimension_semantics = [#tpu.dimension_semantics<parallel>], iteration_bounds = array<i64: 2>, scalar_prefetch = 0 : i64, scratch_operands = 0 : i64, tpu.core_type = #tpu.core_type<tc>, window_params = [{transform_indices = @transform_0, window_bounds = array<i64: 1, 256, 64>}, {pipeline_mode = #tpu.pipeline_mode<synchronous>, transform_indices = @transform_1, window_bounds = array<i64: 4, 256>}, {pipeline_mode = #tpu.pipeline_mode<synchronous>, transform_indices = @transform_2, window_bounds = array<i64: 4, 1>}, {pipeline_mode = #tpu.pipeline_mode<synchronous>, transform_indices = @transform_3, window_bounds = array<i64: 4, 4>}, {pipeline_mode = #tpu.pipeline_mode<synchronous>, transform_indices = @transform_4, window_bounds = array<i64: 1, 1>}, {pipeline_mode = #tpu.pipeline_mode<synchronous>, transform_indices = @transform_5, window_bounds = array<i64: 64, 64>}, {pipeline_mode = #tpu.pipeline_mode<synchronous>, transform_indices = @transform_6, window_bounds = array<i64: 1, 64>}, {pipeline_mode = #tpu.pipeline_mode<synchronous>, transform_indices = @transform_7, window_bounds = array<i64: 64, 16>}, {pipeline_mode = #tpu.pipeline_mode<synchronous>, transform_indices = @transform_8, window_bounds = array<i64: 1, 16>}, {pipeline_mode = #tpu.pipeline_mode<synchronous>, transform_indices = @transform_9, window_bounds = array<i64: 64, 16>}, {pipeline_mode = #tpu.pipeline_mode<synchronous>, transform_indices = @transform_10, window_bounds = array<i64: 1, 16>}, {pipeline_mode = #tpu.pipeline_mode<synchronous>, transform_indices = @transform_11, window_bounds = array<i64: 1, 64>}, {pipeline_mode = #tpu.pipeline_mode<synchronous>, transform_indices = @transform_12, window_bounds = array<i64: 1, 64>}, {pipeline_mode = #tpu.pipeline_mode<synchronous>, transform_indices = @transform_13, window_bounds = array<i64: 1, 64>}, {pipeline_mode = #tpu.pipeline_mode<synchronous>, transform_indices = @transform_14, window_bounds = array<i64: 1, 64>}, {pipeline_mode = #tpu.pipeline_mode<synchronous>, transform_indices = @transform_15, window_bounds = array<i64: 1, 4>}, {pipeline_mode = #tpu.pipeline_mode<synchronous>, transform_indices = @transform_16, window_bounds = array<i64: 1, 1>}, {transform_indices = @transform_17, window_bounds = array<i64: 1, 1, 64>}]} {
    %c0 = arith.constant 0 : index
    %c0_0 = arith.constant 0 : index
    %0 = vector.load %arg2[%c0, %c0_0] : memref<4x256xf32, #tpu.memory_space<vmem>>, vector<4x256xf32>
    %c0_1 = arith.constant 0 : index
    %c0_2 = arith.constant 0 : index
    %1 = vector.load %arg3[%c0_1, %c0_2] : memref<4x1xf32, #tpu.memory_space<vmem>>, vector<4x1xf32>
    %c0_3 = arith.constant 0 : index
    %c0_4 = arith.constant 0 : index
    %2 = vector.load %arg4[%c0_3, %c0_4] : memref<4x4xf32, #tpu.memory_space<vmem>>, vector<4x4xf32>
    %c0_5 = arith.constant 0 : index
    %c0_6 = arith.constant 0 : index
    %3 = vector.load %arg5[%c0_5, %c0_6] : memref<1x1xf32, #tpu.memory_space<vmem>>, vector<1x1xf32>
    %c0_7 = arith.constant 0 : index
    %c0_8 = arith.constant 0 : index
    %4 = vector.load %arg6[%c0_7, %c0_8] : memref<64x64xf32, #tpu.memory_space<vmem>>, vector<64x64xf32>
    %c0_9 = arith.constant 0 : index
    %c0_10 = arith.constant 0 : index
    %5 = vector.load %arg7[%c0_9, %c0_10] : memref<1x64xf32, #tpu.memory_space<vmem>>, vector<1x64xf32>
    %c0_11 = arith.constant 0 : index
    %c0_12 = arith.constant 0 : index
    %6 = vector.load %arg8[%c0_11, %c0_12] : memref<64x16xf32, #tpu.memory_space<vmem>>, vector<64x16xf32>
    %c0_13 = arith.constant 0 : index
    %c0_14 = arith.constant 0 : index
    %7 = vector.load %arg9[%c0_13, %c0_14] : memref<1x16xf32, #tpu.memory_space<vmem>>, vector<1x16xf32>
    %c0_15 = arith.constant 0 : index
    %c0_16 = arith.constant 0 : index
    %8 = vector.load %arg10[%c0_15, %c0_16] : memref<64x16xf32, #tpu.memory_space<vmem>>, vector<64x16xf32>
    %c0_17 = arith.constant 0 : index
    %c0_18 = arith.constant 0 : index
    %9 = vector.load %arg11[%c0_17, %c0_18] : memref<1x16xf32, #tpu.memory_space<vmem>>, vector<1x16xf32>
    %c0_19 = arith.constant 0 : index
    %c0_20 = arith.constant 0 : index
    %10 = vector.load %arg14[%c0_19, %c0_20] : memref<1x64xf32, #tpu.memory_space<vmem>>, vector<1x64xf32>
    %c0_21 = arith.constant 0 : index
    %c0_22 = arith.constant 0 : index
    %11 = vector.load %arg12[%c0_21, %c0_22] : memref<1x64xf32, #tpu.memory_space<vmem>>, vector<1x64xf32>
    %c0_23 = arith.constant 0 : index
    %c0_24 = arith.constant 0 : index
    %12 = vector.load %arg15[%c0_23, %c0_24] : memref<1x64xf32, #tpu.memory_space<vmem>>, vector<1x64xf32>
    %cst = arith.constant 9.99999974E-6 : f32
    %13 = vector.broadcast %cst : f32 to vector<1x64xf32>
    %14 = arith.addf %12, %13 : vector<1x64xf32>
    %15 = math.rsqrt %14 : vector<1x64xf32>
    %16 = arith.mulf %11, %15 : vector<1x64xf32>
    %c0_25 = arith.constant 0 : index
    %c0_26 = arith.constant 0 : index
    %17 = vector.load %arg13[%c0_25, %c0_26] : memref<1x64xf32, #tpu.memory_space<vmem>>, vector<1x64xf32>
    %c0_27 = arith.constant 0 : index
    %c0_28 = arith.constant 0 : index
    %18 = vector.load %arg16[%c0_27, %c0_28] : memref<1x4xf32, #tpu.memory_space<vmem>>, vector<1x4xf32>
    %c0_29 = arith.constant 0 : index
    %c0_30 = arith.constant 0 : index
    %19 = vector.load %arg17[%c0_29, %c0_30] : memref<1x1xf32, #tpu.memory_space<vmem>>, vector<1x1xf32>
    %c0_31 = arith.constant 0 : index
    %c0_32 = arith.constant 0 : index
    %c0_33 = arith.constant 0 : index
    %20 = vector.load %arg1[%c0_31, %c0_32, %c0_33] : memref<1x256x64xf32, #tpu.memory_space<vmem>>, vector<1x256x64xf32>
    %21 = vector.shape_cast %20 : vector<1x256x64xf32> to vector<256x64xf32>
    %cst_34 = arith.constant dense<0.000000e+00> : vector<4x64xf32>
    %22 = tpu.matmul %0, %21, %cst_34 {dimension_numbers = #tpu.dot_dimension_numbers<[1], [0], [0], [1], [0, 0, 1, 1], [], []>} : vector<4x256xf32>, vector<256x64xf32>, vector<4x64xf32> -> vector<4x64xf32>
    %23 = vector.broadcast %1 : vector<4x1xf32> to vector<4x64xf32>
    %24 = arith.addf %22, %23 : vector<4x64xf32>
    %cst_35 = arith.constant dense<0.000000e+00> : vector<4x16xf32>
    %25 = tpu.matmul %24, %6, %cst_35 {dimension_numbers = #tpu.dot_dimension_numbers<[1], [0], [0], [1], [0, 0, 1, 1], [], []>} : vector<4x64xf32>, vector<64x16xf32>, vector<4x16xf32> -> vector<4x16xf32>
    %26 = vector.broadcast %7 : vector<1x16xf32> to vector<4x16xf32>
    %27 = arith.addf %25, %26 : vector<4x16xf32>
    %cst_36 = arith.constant dense<0.000000e+00> : vector<4x16xf32>
    %28 = tpu.matmul %24, %8, %cst_36 {dimension_numbers = #tpu.dot_dimension_numbers<[1], [0], [0], [1], [0, 0, 1, 1], [], []>} : vector<4x64xf32>, vector<64x16xf32>, vector<4x16xf32> -> vector<4x16xf32>
    %29 = vector.broadcast %9 : vector<1x16xf32> to vector<4x16xf32>
    %30 = arith.addf %28, %29 : vector<4x16xf32>
    %cst_37 = arith.constant dense<0.000000e+00> : vector<4xf32>
    %31 = vector.multi_reduction <add>, %27, %cst_37 [1] : vector<4x16xf32> to vector<4xf32>
    %32 = vector.shape_cast %31 : vector<4xf32> to vector<4x1xf32>
    %cst_38 = arith.constant 1.600000e+01 : f32
    %33 = vector.broadcast %cst_38 : f32 to vector<4x1xf32>
    %34 = arith.divf %32, %33 : vector<4x1xf32>
    %cst_39 = arith.constant dense<0.000000e+00> : vector<4xf32>
    %35 = vector.multi_reduction <add>, %30, %cst_39 [1] : vector<4x16xf32> to vector<4xf32>
    %36 = vector.shape_cast %35 : vector<4xf32> to vector<4x1xf32>
    %cst_40 = arith.constant 1.600000e+01 : f32
    %37 = vector.broadcast %cst_40 : f32 to vector<4x1xf32>
    %38 = arith.divf %36, %37 : vector<4x1xf32>
    %39 = tpu.transpose %34, [1, 0] : vector<4x1xf32> -> vector<1x4xf32>
    %40 = vector.broadcast %39 : vector<1x4xf32> to vector<4x4xf32>
    %41 = vector.broadcast %38 : vector<4x1xf32> to vector<4x4xf32>
    %42 = arith.subf %40, %41 : vector<4x4xf32>
    %43 = math.tanh %42 : vector<4x4xf32>
    %44 = vector.broadcast %3 : vector<1x1xf32> to vector<4x4xf32>
    %45 = arith.mulf %43, %44 : vector<4x4xf32>
    %46 = arith.addf %2, %45 : vector<4x4xf32>
    %cst_41 = arith.constant dense<0.000000e+00> : vector<4x64xf32>
    %47 = tpu.matmul %24, %4, %cst_41 {dimension_numbers = #tpu.dot_dimension_numbers<[1], [0], [0], [1], [0, 0, 1, 1], [], []>} : vector<4x64xf32>, vector<64x64xf32>, vector<4x64xf32> -> vector<4x64xf32>
    %48 = vector.broadcast %5 : vector<1x64xf32> to vector<4x64xf32>
    %49 = arith.addf %47, %48 : vector<4x64xf32>
    %cst_42 = arith.constant dense<0.000000e+00> : vector<4x64xf32>
    %50 = tpu.matmul %46, %49, %cst_42 {dimension_numbers = #tpu.dot_dimension_numbers<[1], [0], [0], [1], [0, 0, 1, 1], [], []>} : vector<4x4xf32>, vector<4x64xf32>, vector<4x64xf32> -> vector<4x64xf32>
    %51 = vector.broadcast %10 : vector<1x64xf32> to vector<4x64xf32>
    %52 = arith.subf %50, %51 : vector<4x64xf32>
    %53 = vector.broadcast %16 : vector<1x64xf32> to vector<4x64xf32>
    %54 = arith.mulf %52, %53 : vector<4x64xf32>
    %55 = vector.broadcast %17 : vector<1x64xf32> to vector<4x64xf32>
    %56 = arith.addf %54, %55 : vector<4x64xf32>
    %cst_43 = arith.constant dense<0.000000e+00> : vector<1x64xf32>
    %57 = tpu.matmul %18, %56, %cst_43 {dimension_numbers = #tpu.dot_dimension_numbers<[1], [0], [0], [1], [0, 0, 1, 1], [], []>} : vector<1x4xf32>, vector<4x64xf32>, vector<1x64xf32> -> vector<1x64xf32>
    %58 = vector.broadcast %19 : vector<1x1xf32> to vector<1x64xf32>
    %59 = arith.addf %57, %58 : vector<1x64xf32>
    %c0_44 = arith.constant 0 : index
    %c0_45 = arith.constant 0 : index
    %c0_46 = arith.constant 0 : index
    %60 = vector.load %arg18[%c0_44, %c0_45, %c0_46] : memref<1x1x64xf32, #tpu.memory_space<vmem>>, vector<1x1x64xf32>
    %61 = vector.shape_cast %60 : vector<1x1x64xf32> to vector<1x64xf32>
    %62 = vector.shape_cast %59 : vector<1x64xf32> to vector<1x1x64xf32>
    tpu.vector_store %arg18[%c0_44, %c0_45, %c0_46], %62 {strides = array<i32>} : memref<1x1x64xf32, #tpu.memory_space<vmem>>, vector<1x1x64xf32>,
    return
  }
  func.func @transform_0(%arg0: i32) -> (i32, i32, i32) {
    %c0_i32 = arith.constant 0 : i32
    %c0_i32_0 = arith.constant 0 : i32
    %c0_i32_1 = arith.constant 0 : i32
    return %arg0, %c0_i32, %c0_i32_0 : i32, i32, i32
  }
  func.func @transform_1(%arg0: i32) -> (i32, i32) {
    %c0_i32 = arith.constant 0 : i32
    %c0_i32_0 = arith.constant 0 : i32
    %c0_i32_1 = arith.constant 0 : i32
    return %c0_i32, %c0_i32_0 : i32, i32
  }
  func.func @transform_2(%arg0: i32) -> (i32, i32) {
    %c0_i32 = arith.constant 0 : i32
    %c0_i32_0 = arith.constant 0 : i32
    %c0_i32_1 = arith.constant 0 : i32
    return %c0_i32, %c0_i32_0 : i32, i32
  }
  func.func @transform_3(%arg0: i32) -> (i32, i32) {
    %c0_i32 = arith.constant 0 : i32
    %c0_i32_0 = arith.constant 0 : i32
    %c0_i32_1 = arith.constant 0 : i32
    return %c0_i32, %c0_i32_0 : i32, i32
  }
  func.func @transform_4(%arg0: i32) -> (i32, i32) {
    %c0_i32 = arith.constant 0 : i32
    %c0_i32_0 = arith.constant 0 : i32
    %c0_i32_1 = arith.constant 0 : i32
    return %c0_i32, %c0_i32_0 : i32, i32
  }
  func.func @transform_5(%arg0: i32) -> (i32, i32) {
    %c0_i32 = arith.constant 0 : i32
    %c0_i32_0 = arith.constant 0 : i32
    %c0_i32_1 = arith.constant 0 : i32
    return %c0_i32, %c0_i32_0 : i32, i32
  }
  func.func @transform_6(%arg0: i32) -> (i32, i32) {
    %c0_i32 = arith.constant 0 : i32
    %c0_i32_0 = arith.constant 0 : i32
    %c0_i32_1 = arith.constant 0 : i32
    return %c0_i32, %c0_i32_0 : i32, i32
  }
  func.func @transform_7(%arg0: i32) -> (i32, i32) {
    %c0_i32 = arith.constant 0 : i32
    %c0_i32_0 = arith.constant 0 : i32
    %c0_i32_1 = arith.constant 0 : i32
    return %c0_i32, %c0_i32_0 : i32, i32
  }
  func.func @transform_8(%arg0: i32) -> (i32, i32) {
    %c0_i32 = arith.constant 0 : i32
    %c0_i32_0 = arith.constant 0 : i32
    %c0_i32_1 = arith.constant 0 : i32
    return %c0_i32, %c0_i32_0 : i32, i32
  }
  func.func @transform_9(%arg0: i32) -> (i32, i32) {
    %c0_i32 = arith.constant 0 : i32
    %c0_i32_0 = arith.constant 0 : i32
    %c0_i32_1 = arith.constant 0 : i32
    return %c0_i32, %c0_i32_0 : i32, i32
  }
  func.func @transform_10(%arg0: i32) -> (i32, i32) {
    %c0_i32 = arith.constant 0 : i32
    %c0_i32_0 = arith.constant 0 : i32
    %c0_i32_1 = arith.constant 0 : i32
    return %c0_i32, %c0_i32_0 : i32, i32
  }
  func.func @transform_11(%arg0: i32) -> (i32, i32) {
    %c0_i32 = arith.constant 0 : i32
    %c0_i32_0 = arith.constant 0 : i32
    %c0_i32_1 = arith.constant 0 : i32
    return %c0_i32, %c0_i32_0 : i32, i32
  }
  func.func @transform_12(%arg0: i32) -> (i32, i32) {
    %c0_i32 = arith.constant 0 : i32
    %c0_i32_0 = arith.constant 0 : i32
    %c0_i32_1 = arith.constant 0 : i32
    return %c0_i32, %c0_i32_0 : i32, i32
  }
  func.func @transform_13(%arg0: i32) -> (i32, i32) {
    %c0_i32 = arith.constant 0 : i32
    %c0_i32_0 = arith.constant 0 : i32
    %c0_i32_1 = arith.constant 0 : i32
    return %c0_i32, %c0_i32_0 : i32, i32
  }
  func.func @transform_14(%arg0: i32) -> (i32, i32) {
    %c0_i32 = arith.constant 0 : i32
    %c0_i32_0 = arith.constant 0 : i32
    %c0_i32_1 = arith.constant 0 : i32
    return %c0_i32, %c0_i32_0 : i32, i32
  }
  func.func @transform_15(%arg0: i32) -> (i32, i32) {
    %c0_i32 = arith.constant 0 : i32
    %c0_i32_0 = arith.constant 0 : i32
    %c0_i32_1 = arith.constant 0 : i32
    return %c0_i32, %c0_i32_0 : i32, i32
  }
  func.func @transform_16(%arg0: i32) -> (i32, i32) {
    %c0_i32 = arith.constant 0 : i32
    %c0_i32_0 = arith.constant 0 : i32
    %c0_i32_1 = arith.constant 0 : i32
    return %c0_i32, %c0_i32_0 : i32, i32
  }
  func.func @transform_17(%arg0: i32) -> (i32, i32, i32) {
    %c0_i32 = arith.constant 0 : i32
    %c0_i32_0 = arith.constant 0 : i32
    %c0_i32_1 = arith.constant 0 : i32
    return %arg0, %c0_i32, %c0_i32_0 : i32, i32, i32
  }
}

</mosaic_0001>

<llo_original>
// kernel: tpu_custom_call.1
$region0: #{tpu_custom_call.1}
  #allocation0 [shape = 'u32[]', space=smem, size = 0x4, offset = 0x4, fixed_abs, tag = 'smem constant byte address 0x4 - core index']
  #allocation1 [shape = 'u32[72,128]{1,0:T(1,128)}', space=vmem, size = 0x9000, scoped, tag = 'internal scratch']
  #allocation2 [shape = 'f32[1,1]{1,0:T(1,128)S(1)}', space=vmem, size = 0x200, scoped, tag = 'scoped memory for tpu_custom_call.1']
  #allocation3 [shape = 'f32[1,1]{1,0:T(1,128)S(1)}', space=vmem, size = 0x200, scoped, tag = 'scoped memory for tpu_custom_call.1']
  %s0 = inlined_call_operand.vmem [shape: f32[2,256,64], index: 0, kind: input, shape index: {}]
  %s1 = inlined_call_operand.vmem [shape: f32[4,256], index: 1, kind: input, shape index: {}]
  %s2 = inlined_call_operand.vmem [shape: f32[4,1], index: 2, kind: input, shape index: {}]
  %s3 = inlined_call_operand.vmem [shape: f32[4,4], index: 3, kind: input, shape index: {}]
  %s4 = inlined_call_operand.<no memory space> [shape: f32[1,1], index: 4, kind: input, shape index: {}]
  %s5 = inlined_call_operand.vmem [shape: f32[64,64], index: 5, kind: input, shape index: {}]
  %s6 = inlined_call_operand.vmem [shape: f32[1,64], index: 6, kind: input, shape index: {}]
  %s7 = inlined_call_operand.vmem [shape: f32[64,16], index: 7, kind: input, shape index: {}]
  %s8 = inlined_call_operand.vmem [shape: f32[1,16], index: 8, kind: input, shape index: {}]
  %s9 = inlined_call_operand.vmem [shape: f32[64,16], index: 9, kind: input, shape index: {}]
  %s10 = inlined_call_operand.vmem [shape: f32[1,16], index: 10, kind: input, shape index: {}]
  %s11 = inlined_call_operand.vmem [shape: f32[1,64], index: 11, kind: input, shape index: {}]
  %s12 = inlined_call_operand.vmem [shape: f32[1,64], index: 12, kind: input, shape index: {}]
  %s13 = inlined_call_operand.vmem [shape: f32[1,64], index: 13, kind: input, shape index: {}]
  %s14 = inlined_call_operand.vmem [shape: f32[1,64], index: 14, kind: input, shape index: {}]
  %s15 = inlined_call_operand.vmem [shape: f32[1,4], index: 15, kind: input, shape index: {}]
  %s16 = inlined_call_operand.<no memory space> [shape: f32[1,1], index: 16, kind: input, shape index: {}]
  %s17 = inlined_call_operand.hbm [shape: f32[2,1,64], index: 17, kind: output, shape index: {}]
  %s18 = sld [smem:[#allocation0]]
  $region101: #{tpu_custom_call.1} parent=0
    _
  %s20 = ssub.s32 1, %s18
  %s21 = scalar_select 0, %s20, %s18
  %v22 = vstv %s4
  %23 = vst [vmem:[#allocation2] sm:$0x1] %v22
  %v24 = vstv %s16
  %25 = vst [vmem:[#allocation3] sm:$0x1] %v24
  $region1: #{tpu_custom_call.1} parent=0
    #allocation4 [shape = 'u8[1024]{0}', space=vmem, size = 0x400, scoped, tag = 'output window, operand 0']
    #allocation5 [shape = 's32[2]{0}', space=sflag, size = 0x8, scoped, tag = 'scoped memory for tpu_custom_call.1']
    %26 = vsyncpa [#allocation5], 0
    %s27 = scalar_lea.sflag [#allocation5], 1
    %28 = vsyncpa %s27, 0
    loop: start=0, step=1, limit=4
    $region2: #{tpu_custom_call.1} parent=1 // loop_pre_header
      _
    $region3: #{tpu_custom_call.1} parent=1 // loop_header
      %s30 = sphi 0, %s34
      %p31 = scmp.ge.s32.totalorder %s30, 4
      %s40 = sphi 0, %s42
      %s43 = sphi 0, %s40
      %s44 = sphi 0, %s43
      %s60 = sphi 0, %s44
      %s64 = sphi 0, %s64
      %s66 = sphi 0, %s64
      %s67 = sphi 0, %s66
      %s81 = sphi 0, %s67
      %s85 = sphi 0, %s85
      %s87 = sphi 0, %s85
      %s88 = sphi 0, %s87
      %s102 = sphi 0, %s88
      %s106 = sphi 0, %s106
      %s108 = sphi 0, %s106
      %s109 = sphi 0, %s108
      %s123 = sphi 0, %s109
      %s127 = sphi 0, %s127
      %s129 = sphi 0, %s127
      %s130 = sphi 0, %s129
      %s144 = sphi 0, %s130
      %s148 = sphi 0, %s148
      %s150 = sphi 0, %s148
      %s151 = sphi 0, %s150
      %s165 = sphi 0, %s151
      %s169 = sphi 0, %s169
      %s171 = sphi 0, %s169
      %s172 = sphi 0, %s171
      %s186 = sphi 0, %s172
      %s190 = sphi 0, %s190
      %s192 = sphi 0, %s190
      %s193 = sphi 0, %s192
      %s207 = sphi 0, %s193
      %s211 = sphi 0, %s211
      %s213 = sphi 0, %s211
      %s214 = sphi 0, %s213
      %s228 = sphi 0, %s214
      %s232 = sphi 0, %s232
      %s234 = sphi 0, %s232
      %s235 = sphi 0, %s234
      %s249 = sphi 0, %s235
      %s253 = sphi 0, %s253
      %s255 = sphi 0, %s253
      %s256 = sphi 0, %s255
      %s270 = sphi 0, %s256
      %s274 = sphi 0, %s274
      %s276 = sphi 0, %s274
      %s277 = sphi 0, %s276
      %s291 = sphi 0, %s277
      %s295 = sphi 0, %s295
      %s297 = sphi 0, %s295
      %s298 = sphi 0, %s297
      %s312 = sphi 0, %s298
      %s316 = sphi 0, %s316
      %s318 = sphi 0, %s316
      %s319 = sphi 0, %s318
      %s333 = sphi 0, %s319
      %s337 = sphi 0, %s337
      %s339 = sphi 0, %s337
      %s340 = sphi 0, %s339
      %s354 = sphi 0, %s340
      %s358 = sphi 0, %s358
      %s360 = sphi 0, %s358
      %s361 = sphi 0, %s360
      %s375 = sphi 0, %s361
      %s379 = sphi 0, %s379
      %s381 = sphi 0, %s379
      %s382 = sphi 0, %s381
      %s396 = sphi 0, %s382
      %s402 = sphi 0, %s404
      %s405 = sphi 0, %s402
      %s406 = sphi 0, %s405
      %s422 = sphi 0, %s406
    $region4: #{tpu_custom_call.1} parent=1 // loop_header_branch
      %33 = sbr.rel (%p31) target = $region8
    $region5: #{tpu_custom_call.1} parent=1 // loop_body
      %s35 = ssub.s32 %s30, 1
      %s36 = ssub.s32 %s30, 2
      %s37 = sadd.s32 %s30, 1
      %s38 = ssub.s32 %s30, %s37
      %p39 = scmp.eq.s32.totalorder %s38, 0
      %s41 = sadd.s32 %s40, 1
      %s42 = scalar_select %p39, %s40, %s41
      %p45 = pneg %p39
      %p46 = scmp.eq.s32.totalorder %s30, 1
      %p47 = por %p45, %p46
      %p48 = scmp.ne.s32.totalorder %s40, %s43
      %p49 = scmp.eq.s32.totalorder %s30, 0
      %p50 = por %p48, %p49
      %p51 = scmp.ne.s32.totalorder %s40, %s43
      %p52 = scmp.eq.s32.totalorder %s35, 1
      %p53 = por %p51, %p52
      %p54 = scmp.ne.s32.totalorder %s43, %s44
      %p55 = scmp.eq.s32.totalorder %s35, 0
      %p56 = por %p54, %p55
      %p57 = scmp.ne.s32.totalorder %s43, %s44
      %p58 = scmp.eq.s32.totalorder %s36, 1
      %p59 = por %p57, %p58
      %p61 = scmp.ne.s32.totalorder %s44, %s60
      %p62 = scmp.eq.s32.totalorder %s36, 0
      %p63 = por %p61, %p62
      %s65 = sadd.s32 %s64, 1
      %p68 = scmp.eq.s32.totalorder %s30, 1
      %p69 = scmp.ne.s32.totalorder %s64, %s66
      %p70 = scmp.eq.s32.totalorder %s30, 0
      %p71 = por %p69, %p70
      %p72 = scmp.ne.s32.totalorder %s64, %s66
      %p73 = scmp.eq.s32.totalorder %s35, 1
      %p74 = por %p72, %p73
      %p75 = scmp.ne.s32.totalorder %s66, %s67
      %p76 = scmp.eq.s32.totalorder %s35, 0
      %p77 = por %p75, %p76
      %p78 = scmp.ne.s32.totalorder %s66, %s67
      %p79 = scmp.eq.s32.totalorder %s36, 1
      %p80 = por %p78, %p79
      %p82 = scmp.ne.s32.totalorder %s67, %s81
      %p83 = scmp.eq.s32.totalorder %s36, 0
      %p84 = por %p82, %p83
      %s86 = sadd.s32 %s85, 1
      %p89 = scmp.eq.s32.totalorder %s30, 1
      %p90 = scmp.ne.s32.totalorder %s85, %s87
      %p91 = scmp.eq.s32.totalorder %s30, 0
      %p92 = por %p90, %p91
      %p93 = scmp.ne.s32.totalorder %s85, %s87
      %p94 = scmp.eq.s32.totalorder %s35, 1
      %p95 = por %p93, %p94
      %p96 = scmp.ne.s32.totalorder %s87, %s88
      %p97 = scmp.eq.s32.totalorder %s35, 0
      %p98 = por %p96, %p97
      %p99 = scmp.ne.s32.totalorder %s87, %s88
      %p100 = scmp.eq.s32.totalorder %s36, 1
      %p101 = por %p99, %p100
      %p103 = scmp.ne.s32.totalorder %s88, %s102
      %p104 = scmp.eq.s32.totalorder %s36, 0
      %p105 = por %p103, %p104
      %s107 = sadd.s32 %s106, 1
      %p110 = scmp.eq.s32.totalorder %s30, 1
      %p111 = scmp.ne.s32.totalorder %s106, %s108
      %p112 = scmp.eq.s32.totalorder %s30, 0
      %p113 = por %p111, %p112
      %p114 = scmp.ne.s32.totalorder %s106, %s108
      %p115 = scmp.eq.s32.totalorder %s35, 1
      %p116 = por %p114, %p115
      %p117 = scmp.ne.s32.totalorder %s108, %s109
      %p118 = scmp.eq.s32.totalorder %s35, 0
      %p119 = por %p117, %p118
      %p120 = scmp.ne.s32.totalorder %s108, %s109
      %p121 = scmp.eq.s32.totalorder %s36, 1
      %p122 = por %p120, %p121
      %p124 = scmp.ne.s32.totalorder %s109, %s123
      %p125 = scmp.eq.s32.totalorder %s36, 0
      %p126 = por %p124, %p125
      %s128 = sadd.s32 %s127, 1
      %p131 = scmp.eq.s32.totalorder %s30, 1
      %p132 = scmp.ne.s32.totalorder %s127, %s129
      %p133 = scmp.eq.s32.totalorder %s30, 0
      %p134 = por %p132, %p133
      %p135 = scmp.ne.s32.totalorder %s127, %s129
      %p136 = scmp.eq.s32.totalorder %s35, 1
      %p137 = por %p135, %p136
      %p138 = scmp.ne.s32.totalorder %s129, %s130
      %p139 = scmp.eq.s32.totalorder %s35, 0
      %p140 = por %p138, %p139
      %p141 = scmp.ne.s32.totalorder %s129, %s130
      %p142 = scmp.eq.s32.totalorder %s36, 1
      %p143 = por %p141, %p142
      %p145 = scmp.ne.s32.totalorder %s130, %s144
      %p146 = scmp.eq.s32.totalorder %s36, 0
      %p147 = por %p145, %p146
      %s149 = sadd.s32 %s148, 1
      %p152 = scmp.eq.s32.totalorder %s30, 1
      %p153 = scmp.ne.s32.totalorder %s148, %s150
      %p154 = scmp.eq.s32.totalorder %s30, 0
      %p155 = por %p153, %p154
      %p156 = scmp.ne.s32.totalorder %s148, %s150
      %p157 = scmp.eq.s32.totalorder %s35, 1
      %p158 = por %p156, %p157
      %p159 = scmp.ne.s32.totalorder %s150, %s151
      %p160 = scmp.eq.s32.totalorder %s35, 0
      %p161 = por %p159, %p160
      %p162 = scmp.ne.s32.totalorder %s150, %s151
      %p163 = scmp.eq.s32.totalorder %s36, 1
      %p164 = por %p162, %p163
      %p166 = scmp.ne.s32.totalorder %s151, %s165
      %p167 = scmp.eq.s32.totalorder %s36, 0
      %p168 = por %p166, %p167
      %s170 = sadd.s32 %s169, 1
      %p173 = scmp.eq.s32.totalorder %s30, 1
      %p174 = scmp.ne.s32.totalorder %s169, %s171
      %p175 = scmp.eq.s32.totalorder %s30, 0
      %p176 = por %p174, %p175
      %p177 = scmp.ne.s32.totalorder %s169, %s171
      %p178 = scmp.eq.s32.totalorder %s35, 1
      %p179 = por %p177, %p178
      %p180 = scmp.ne.s32.totalorder %s171, %s172
      %p181 = scmp.eq.s32.totalorder %s35, 0
      %p182 = por %p180, %p181
      %p183 = scmp.ne.s32.totalorder %s171, %s172
      %p184 = scmp.eq.s32.totalorder %s36, 1
      %p185 = por %p183, %p184
      %p187 = scmp.ne.s32.totalorder %s172, %s186
      %p188 = scmp.eq.s32.totalorder %s36, 0
      %p189 = por %p187, %p188
      %s191 = sadd.s32 %s190, 1
      %p194 = scmp.eq.s32.totalorder %s30, 1
      %p195 = scmp.ne.s32.totalorder %s190, %s192
      %p196 = scmp.eq.s32.totalorder %s30, 0
      %p197 = por %p195, %p196
      %p198 = scmp.ne.s32.totalorder %s190, %s192
      %p199 = scmp.eq.s32.totalorder %s35, 1
      %p200 = por %p198, %p199
      %p201 = scmp.ne.s32.totalorder %s192, %s193
      %p202 = scmp.eq.s32.totalorder %s35, 0
      %p203 = por %p201, %p202
      %p204 = scmp.ne.s32.totalorder %s192, %s193
      %p205 = scmp.eq.s32.totalorder %s36, 1
      %p206 = por %p204, %p205
      %p208 = scmp.ne.s32.totalorder %s193, %s207
      %p209 = scmp.eq.s32.totalorder %s36, 0
      %p210 = por %p208, %p209
      %s212 = sadd.s32 %s211, 1
      %p215 = scmp.eq.s32.totalorder %s30, 1
      %p216 = scmp.ne.s32.totalorder %s211, %s213
      %p217 = scmp.eq.s32.totalorder %s30, 0
      %p218 = por %p216, %p217
      %p219 = scmp.ne.s32.totalorder %s211, %s213
      %p220 = scmp.eq.s32.totalorder %s35, 1
      %p221 = por %p219, %p220
      %p222 = scmp.ne.s32.totalorder %s213, %s214
      %p223 = scmp.eq.s32.totalorder %s35, 0
      %p224 = por %p222, %p223
      %p225 = scmp.ne.s32.totalorder %s213, %s214
      %p226 = scmp.eq.s32.totalorder %s36, 1
      %p227 = por %p225, %p226
      %p229 = scmp.ne.s32.totalorder %s214, %s228
      %p230 = scmp.eq.s32.totalorder %s36, 0
      %p231 = por %p229, %p230
      %s233 = sadd.s32 %s232, 1
      %p236 = scmp.eq.s32.totalorder %s30, 1
      %p237 = scmp.ne.s32.totalorder %s232, %s234
      %p238 = scmp.eq.s32.totalorder %s30, 0
      %p239 = por %p237, %p238
      %p240 = scmp.ne.s32.totalorder %s232, %s234
      %p241 = scmp.eq.s32.totalorder %s35, 1
      %p242 = por %p240, %p241
      %p243 = scmp.ne.s32.totalorder %s234, %s235
      %p244 = scmp.eq.s32.totalorder %s35, 0
      %p245 = por %p243, %p244
      %p246 = scmp.ne.s32.totalorder %s234, %s235
      %p247 = scmp.eq.s32.totalorder %s36, 1
      %p248 = por %p246, %p247
      %p250 = scmp.ne.s32.totalorder %s235, %s249
      %p251 = scmp.eq.s32.totalorder %s36, 0
      %p252 = por %p250, %p251
      %s254 = sadd.s32 %s253, 1
      %p257 = scmp.eq.s32.totalorder %s30, 1
      %p258 = scmp.ne.s32.totalorder %s253, %s255
      %p259 = scmp.eq.s32.totalorder %s30, 0
      %p260 = por %p258, %p259
      %p261 = scmp.ne.s32.totalorder %s253, %s255
      %p262 = scmp.eq.s32.totalorder %s35, 1
      %p263 = por %p261, %p262
      %p264 = scmp.ne.s32.totalorder %s255, %s256
      %p265 = scmp.eq.s32.totalorder %s35, 0
      %p266 = por %p264, %p265
      %p267 = scmp.ne.s32.totalorder %s255, %s256
      %p268 = scmp.eq.s32.totalorder %s36, 1
      %p269 = por %p267, %p268
      %p271 = scmp.ne.s32.totalorder %s256, %s270
      %p272 = scmp.eq.s32.totalorder %s36, 0
      %p273 = por %p271, %p272
      %s275 = sadd.s32 %s274, 1
      %p278 = scmp.eq.s32.totalorder %s30, 1
      %p279 = scmp.ne.s32.totalorder %s274, %s276
      %p280 = scmp.eq.s32.totalorder %s30, 0
      %p281 = por %p279, %p280
      %p282 = scmp.ne.s32.totalorder %s274, %s276
      %p283 = scmp.eq.s32.totalorder %s35, 1
      %p284 = por %p282, %p283
      %p285 = scmp.ne.s32.totalorder %s276, %s277
      %p286 = scmp.eq.s32.totalorder %s35, 0
      %p287 = por %p285, %p286
      %p288 = scmp.ne.s32.totalorder %s276, %s277
      %p289 = scmp.eq.s32.totalorder %s36, 1
      %p290 = por %p288, %p289
      %p292 = scmp.ne.s32.totalorder %s277, %s291
      %p293 = scmp.eq.s32.totalorder %s36, 0
      %p294 = por %p292, %p293
      %s296 = sadd.s32 %s295, 1
      %p299 = scmp.eq.s32.totalorder %s30, 1
      %p300 = scmp.ne.s32.totalorder %s295, %s297
      %p301 = scmp.eq.s32.totalorder %s30, 0
      %p302 = por %p300, %p301
      %p303 = scmp.ne.s32.totalorder %s295, %s297
      %p304 = scmp.eq.s32.totalorder %s35, 1
      %p305 = por %p303, %p304
      %p306 = scmp.ne.s32.totalorder %s297, %s298
      %p307 = scmp.eq.s32.totalorder %s35, 0
      %p308 = por %p306, %p307
      %p309 = scmp.ne.s32.totalorder %s297, %s298
      %p310 = scmp.eq.s32.totalorder %s36, 1
      %p311 = por %p309, %p310
      %p313 = scmp.ne.s32.totalorder %s298, %s312
      %p314 = scmp.eq.s32.totalorder %s36, 0
      %p315 = por %p313, %p314
      %s317 = sadd.s32 %s316, 1
      %p320 = scmp.eq.s32.totalorder %s30, 1
      %p321 = scmp.ne.s32.totalorder %s316, %s318
      %p322 = scmp.eq.s32.totalorder %s30, 0
      %p323 = por %p321, %p322
      %p324 = scmp.ne.s32.totalorder %s316, %s318
      %p325 = scmp.eq.s32.totalorder %s35, 1
      %p326 = por %p324, %p325
      %p327 = scmp.ne.s32.totalorder %s318, %s319
      %p328 = scmp.eq.s32.totalorder %s35, 0
      %p329 = por %p327, %p328
      %p330 = scmp.ne.s32.totalorder %s318, %s319
      %p331 = scmp.eq.s32.totalorder %s36, 1
      %p332 = por %p330, %p331
      %p334 = scmp.ne.s32.totalorder %s319, %s333
      %p335 = scmp.eq.s32.totalorder %s36, 0
      %p336 = por %p334, %p335
      %s338 = sadd.s32 %s337, 1
      %p341 = scmp.eq.s32.totalorder %s30, 1
      %p342 = scmp.ne.s32.totalorder %s337, %s339
      %p343 = scmp.eq.s32.totalorder %s30, 0
      %p344 = por %p342, %p343
      %p345 = scmp.ne.s32.totalorder %s337, %s339
      %p346 = scmp.eq.s32.totalorder %s35, 1
      %p347 = por %p345, %p346
      %p348 = scmp.ne.s32.totalorder %s339, %s340
      %p349 = scmp.eq.s32.totalorder %s35, 0
      %p350 = por %p348, %p349
      %p351 = scmp.ne.s32.totalorder %s339, %s340
      %p352 = scmp.eq.s32.totalorder %s36, 1
      %p353 = por %p351, %p352
      %p355 = scmp.ne.s32.totalorder %s340, %s354
      %p356 = scmp.eq.s32.totalorder %s36, 0
      %p357 = por %p355, %p356
      %s359 = sadd.s32 %s358, 1
      %p362 = scmp.eq.s32.totalorder %s30, 1
      %p363 = scmp.ne.s32.totalorder %s358, %s360
      %p364 = scmp.eq.s32.totalorder %s30, 0
      %p365 = por %p363, %p364
      %p366 = scmp.ne.s32.totalorder %s358, %s360
      %p367 = scmp.eq.s32.totalorder %s35, 1
      %p368 = por %p366, %p367
      %p369 = scmp.ne.s32.totalorder %s360, %s361
      %p370 = scmp.eq.s32.totalorder %s35, 0
      %p371 = por %p369, %p370
      %p372 = scmp.ne.s32.totalorder %s360, %s361
      %p373 = scmp.eq.s32.totalorder %s36, 1
      %p374 = por %p372, %p373
      %p376 = scmp.ne.s32.totalorder %s361, %s375
      %p377 = scmp.eq.s32.totalorder %s36, 0
      %p378 = por %p376, %p377
      %s380 = sadd.s32 %s379, 1
      %p383 = scmp.eq.s32.totalorder %s30, 1
      %p384 = scmp.ne.s32.totalorder %s379, %s381
      %p385 = scmp.eq.s32.totalorder %s30, 0
      %p386 = por %p384, %p385
      %p387 = scmp.ne.s32.totalorder %s379, %s381
      %p388 = scmp.eq.s32.totalorder %s35, 1
      %p389 = por %p387, %p388
      %p390 = scmp.ne.s32.totalorder %s381, %s382
      %p391 = scmp.eq.s32.totalorder %s35, 0
      %p392 = por %p390, %p391
      %p393 = scmp.ne.s32.totalorder %s381, %s382
      %p394 = scmp.eq.s32.totalorder %s36, 1
      %p395 = por %p393, %p394
      %p397 = scmp.ne.s32.totalorder %s382, %s396
      %p398 = scmp.eq.s32.totalorder %s36, 0
      %p399 = por %p397, %p398
      %s400 = ssub.s32 %s30, %s37
      %p401 = scmp.eq.s32.totalorder %s400, 0
      %s403 = sadd.s32 %s402, 1
      %s404 = scalar_select %p401, %s402, %s403
      %p407 = pneg %p401
      %p408 = scmp.eq.s32.totalorder %s30, 1
      %p409 = por %p407, %p408
      %p410 = scmp.ne.s32.totalorder %s402, %s405
      %p411 = scmp.eq.s32.totalorder %s30, 0
      %p412 = por %p410, %p411
      %p413 = scmp.ne.s32.totalorder %s402, %s405
      %p414 = scmp.eq.s32.totalorder %s35, 1
      %p415 = por %p413, %p414
      %p416 = scmp.ne.s32.totalorder %s405, %s406
      %p417 = scmp.eq.s32.totalorder %s35, 0
      %p418 = por %p416, %p417
      %p419 = scmp.ne.s32.totalorder %s405, %s406
      %p420 = scmp.eq.s32.totalorder %s36, 1
      %p421 = por %p419, %p420
      %p423 = scmp.ne.s32.totalorder %s406, %s422
      %p424 = scmp.eq.s32.totalorder %s36, 0
      %p425 = por %p423, %p424
      %p426 = scmp.le.s32.totalorder 1, %s30
      %p427 = scmp.lt.s32.totalorder %s30, 3
      %p428 = pnand %p426, %p427
      %p429 = pneg %p428
      // Predicated region
      $region9: #{tpu_custom_call.1} parent=5 // pred_check
        _
      $region10: #{tpu_custom_call.1} parent=5 // pred_check_branch
        %431 = sbr.rel (%p428) target = $region12
      $region11: #{tpu_custom_call.1} parent=5 // pred_region
        %s432 = ssub.s32 %s30, 1
        // Predicated region
        $region13: #{tpu_custom_call.1} parent=11 // pred_check
          %p433 = pneg %p77
        $region14: #{tpu_custom_call.1} parent=11 // pred_check_branch
          %435 = sbr.rel (%p433) target = $region16
        $region15: #{tpu_custom_call.1} parent=11 // pred_region
          _
        $region16: #{tpu_custom_call.1} parent=11 // pred_fallthru
          _
        // Predicated region
        $region17: #{tpu_custom_call.1} parent=11 // pred_check
          %p436 = pneg %p98
        $region18: #{tpu_custom_call.1} parent=11 // pred_check_branch
          %438 = sbr.rel (%p436) target = $region20
        $region19: #{tpu_custom_call.1} parent=11 // pred_region
          _
        $region20: #{tpu_custom_call.1} parent=11 // pred_fallthru
          _
        // Predicated region
        $region21: #{tpu_custom_call.1} parent=11 // pred_check
          %p439 = pneg %p119
        $region22: #{tpu_custom_call.1} parent=11 // pred_check_branch
          %441 = sbr.rel (%p439) target = $region24
        $region23: #{tpu_custom_call.1} parent=11 // pred_region
          _
        $region24: #{tpu_custom_call.1} parent=11 // pred_fallthru
          _
        // Predicated region
        $region25: #{tpu_custom_call.1} parent=11 // pred_check
          %p442 = pneg %p140
        $region26: #{tpu_custom_call.1} parent=11 // pred_check_branch
          %444 = sbr.rel (%p442) target = $region28
        $region27: #{tpu_custom_call.1} parent=11 // pred_region
          _
        $region28: #{tpu_custom_call.1} parent=11 // pred_fallthru
          _
        // Predicated region
        $region29: #{tpu_custom_call.1} parent=11 // pred_check
          %p445 = pneg %p161
        $region30: #{tpu_custom_call.1} parent=11 // pred_check_branch
          %447 = sbr.rel (%p445) target = $region32
        $region31: #{tpu_custom_call.1} parent=11 // pred_region
          _
        $region32: #{tpu_custom_call.1} parent=11 // pred_fallthru
          _
        // Predicated region
        $region33: #{tpu_custom_call.1} parent=11 // pred_check
          %p448 = pneg %p182
        $region34: #{tpu_custom_call.1} parent=11 // pred_check_branch
          %450 = sbr.rel (%p448) target = $region36
        $region35: #{tpu_custom_call.1} parent=11 // pred_region
          _
        $region36: #{tpu_custom_call.1} parent=11 // pred_fallthru
          _
        // Predicated region
        $region37: #{tpu_custom_call.1} parent=11 // pred_check
          %p451 = pneg %p203
        $region38: #{tpu_custom_call.1} parent=11 // pred_check_branch
          %453 = sbr.rel (%p451) target = $region40
        $region39: #{tpu_custom_call.1} parent=11 // pred_region
          _
        $region40: #{tpu_custom_call.1} parent=11 // pred_fallthru
          _
        // Predicated region
        $region41: #{tpu_custom_call.1} parent=11 // pred_check
          %p454 = pneg %p224
        $region42: #{tpu_custom_call.1} parent=11 // pred_check_branch
          %456 = sbr.rel (%p454) target = $region44
        $region43: #{tpu_custom_call.1} parent=11 // pred_region
          _
        $region44: #{tpu_custom_call.1} parent=11 // pred_fallthru
          _
        // Predicated region
        $region45: #{tpu_custom_call.1} parent=11 // pred_check
          %p457 = pneg %p245
        $region46: #{tpu_custom_call.1} parent=11 // pred_check_branch
          %459 = sbr.rel (%p457) target = $region48
        $region47: #{tpu_custom_call.1} parent=11 // pred_region
          _
        $region48: #{tpu_custom_call.1} parent=11 // pred_fallthru
          _
        // Predicated region
        $region49: #{tpu_custom_call.1} parent=11 // pred_check
          %p460 = pneg %p266
        $region50: #{tpu_custom_call.1} parent=11 // pred_check_branch
          %462 = sbr.rel (%p460) target = $region52
        $region51: #{tpu_custom_call.1} parent=11 // pred_region
          _
        $region52: #{tpu_custom_call.1} parent=11 // pred_fallthru
          _
        // Predicated region
        $region53: #{tpu_custom_call.1} parent=11 // pred_check
          %p463 = pneg %p287
        $region54: #{tpu_custom_call.1} parent=11 // pred_check_branch
          %465 = sbr.rel (%p463) target = $region56
        $region55: #{tpu_custom_call.1} parent=11 // pred_region
          _
        $region56: #{tpu_custom_call.1} parent=11 // pred_fallthru
          _
        // Predicated region
        $region57: #{tpu_custom_call.1} parent=11 // pred_check
          %p466 = pneg %p308
        $region58: #{tpu_custom_call.1} parent=11 // pred_check_branch
          %468 = sbr.rel (%p466) target = $region60
        $region59: #{tpu_custom_call.1} parent=11 // pred_region
          _
        $region60: #{tpu_custom_call.1} parent=11 // pred_fallthru
          _
        // Predicated region
        $region61: #{tpu_custom_call.1} parent=11 // pred_check
          %p469 = pneg %p329
        $region62: #{tpu_custom_call.1} parent=11 // pred_check_branch
          %471 = sbr.rel (%p469) target = $region64
        $region63: #{tpu_custom_call.1} parent=11 // pred_region
          _
        $region64: #{tpu_custom_call.1} parent=11 // pred_fallthru
          _
        // Predicated region
        $region65: #{tpu_custom_call.1} parent=11 // pred_check
          %p472 = pneg %p350
        $region66: #{tpu_custom_call.1} parent=11 // pred_check_branch
          %474 = sbr.rel (%p472) target = $region68
        $region67: #{tpu_custom_call.1} parent=11 // pred_region
          _
        $region68: #{tpu_custom_call.1} parent=11 // pred_fallthru
          _
        // Predicated region
        $region69: #{tpu_custom_call.1} parent=11 // pred_check
          %p475 = pneg %p371
        $region70: #{tpu_custom_call.1} parent=11 // pred_check_branch
          %477 = sbr.rel (%p475) target = $region72
        $region71: #{tpu_custom_call.1} parent=11 // pred_region
          _
        $region72: #{tpu_custom_call.1} parent=11 // pred_fallthru
          _
        // Predicated region
        $region73: #{tpu_custom_call.1} parent=11 // pred_check
          %p478 = pneg %p392
        $region74: #{tpu_custom_call.1} parent=11 // pred_check_branch
          %480 = sbr.rel (%p478) target = $region76
        $region75: #{tpu_custom_call.1} parent=11 // pred_region
          _
        $region76: #{tpu_custom_call.1} parent=11 // pred_fallthru
          _
      $region12: #{tpu_custom_call.1} parent=5 // pred_fallthru
        _
      %p481 = scmp.lt.s32.totalorder %s30, 2
      // Predicated region
      $region77: #{tpu_custom_call.1} parent=5 // pred_check
        %p482 = pneg %p481
      $region78: #{tpu_custom_call.1} parent=5 // pred_check_branch
        %484 = sbr.rel (%p482) target = $region80
      $region79: #{tpu_custom_call.1} parent=5 // pred_region
        // Predicated region
        $region81: #{tpu_custom_call.1} parent=79 // pred_check
          %p485 = pneg %p50
        $region82: #{tpu_custom_call.1} parent=79 // pred_check_branch
          %487 = sbr.rel (%p485) target = $region84
        $region83: #{tpu_custom_call.1} parent=79 // pred_region
          %p488 = scmp.lt.s32.totalorder %s30, 1
          %s489 = scalar_select %p488, %s30, 1
          %s490 = smul.addr %s489, 32
          %s491 = smul.addr %s490, 8
          %s492 = scalar_lea.vmem %s0, %s491
        $region84: #{tpu_custom_call.1} parent=79 // pred_fallthru
          _
      $region80: #{tpu_custom_call.1} parent=5 // pred_fallthru
        _
      %p493 = scmp.le.s32.totalorder 1, %s30
      %p494 = scmp.lt.s32.totalorder %s30, 3
      %p495 = pnand %p493, %p494
      %p496 = pneg %p495
      // Predicated region
      $region85: #{tpu_custom_call.1} parent=5 // pred_check
        _
      $region86: #{tpu_custom_call.1} parent=5 // pred_check_branch
        %498 = sbr.rel (%p495) target = $region88
      $region87: #{tpu_custom_call.1} parent=5 // pred_region
        %s499 = ssub.s32 %s30, 1
        %p500 = scmp.lt.s32.totalorder %s35, 1
        %s501 = scalar_select %p500, %s35, 1
        %s502 = smul.addr %s501, 32
        %s503 = smul.addr %s502, 8
        %s504 = scalar_lea.vmem %s0, %s503
        %p505 = pneg %p56
        %p506 = pneg %p53
        %p507 = pneg %p77
        %p508 = pneg %p74
        %p509 = pneg %p98
        %p510 = pneg %p95
        %p511 = pneg %p119
        %p512 = pneg %p116
        %p513 = pneg %p140
        %p514 = pneg %p137
        %p515 = pneg %p161
        %p516 = pneg %p158
        %p517 = pneg %p182
        %p518 = pneg %p179
        %p519 = pneg %p203
        %p520 = pneg %p200
        %p521 = pneg %p224
        %p522 = pneg %p221
        %p523 = pneg %p245
        %p524 = pneg %p242
        %p525 = pneg %p266
        %p526 = pneg %p263
        %p527 = pneg %p287
        %p528 = pneg %p284
        %p529 = pneg %p308
        %p530 = pneg %p305
        %p531 = pneg %p329
        %p532 = pneg %p326
        %p533 = pneg %p350
        %p534 = pneg %p347
        %p535 = pneg %p371
        %p536 = pneg %p368
        %p537 = pneg %p392
        %p538 = pneg %p389
        %p539 = pneg %p418
        %p540 = pneg %p415
        %s541 = sand.u32 %s405, 1
        %s542 = scalar_lea.sflag [#allocation5], %s541
        %s543 = sand.u32 %s405, 1
        %s544 = scalar_lea.vmem [#allocation4], %s543
        %p545 = scmp.lt.s32.totalorder %s35, 1
        %s546 = scalar_select %p545, %s35, 1
        %s547 = smul.addr %s546, 32
        %s548 = smul.addr %s547, 8
        %s549 = scalar_lea.vmem %s0, %s548
        %v550 = vld [vmem:[%s1] sm:$0xff]
        %v551 = vld [vmem:[%s2] sm:$0xf]
        %v552 = vld [vmem:[%s3] sm:$0xf]
        %v553 = vld [vmem:[#allocation2] sm:$0x1]
        %v554 = vld [vmem:[%s5] sm:$0xff]
        %v555 = vld [vmem:[%s5 + $0x8] sm:$0xff]
        %v556 = vld [vmem:[%s5 + $0x10] sm:$0xff]
        %v557 = vld [vmem:[%s5 + $0x18] sm:$0xff]
        %v558 = vld [vmem:[%s5 + $0x20] sm:$0xff]
        %v559 = vld [vmem:[%s5 + $0x28] sm:$0xff]
        %v560 = vld [vmem:[%s5 + $0x30] sm:$0xff]
        %v561 = vld [vmem:[%s5 + $0x38] sm:$0xff]
        %v562 = vld [vmem:[%s6] sm:$0x1]
        %v563 = vld [vmem:[%s7] sm:$0xff]
        %v564 = vld [vmem:[%s7 + $0x8] sm:$0xff]
        %v565 = vld [vmem:[%s7 + $0x10] sm:$0xff]
        %v566 = vld [vmem:[%s7 + $0x18] sm:$0xff]
        %v567 = vld [vmem:[%s7 + $0x20] sm:$0xff]
        %v568 = vld [vmem:[%s7 + $0x28] sm:$0xff]
        %v569 = vld [vmem:[%s7 + $0x30] sm:$0xff]
        %v570 = vld [vmem:[%s7 + $0x38] sm:$0xff]
        %v571 = vld [vmem:[%s8] sm:$0x1]
        %v572 = vld [vmem:[%s9] sm:$0xff]
        %v573 = vld [vmem:[%s9 + $0x8] sm:$0xff]
        %v574 = vld [vmem:[%s9 + $0x10] sm:$0xff]
        %v575 = vld [vmem:[%s9 + $0x18] sm:$0xff]
        %v576 = vld [vmem:[%s9 + $0x20] sm:$0xff]
        %v577 = vld [vmem:[%s9 + $0x28] sm:$0xff]
        %v578 = vld [vmem:[%s9 + $0x30] sm:$0xff]
        %v579 = vld [vmem:[%s9 + $0x38] sm:$0xff]
        %v580 = vld [vmem:[%s10] sm:$0x1]
        %v581 = vld [vmem:[%s13] sm:$0x1]
        %v582 = vld [vmem:[%s11] sm:$0x1]
        %v583 = vld [vmem:[%s14] sm:$0x1]
        %v584 = vadd.f32 %v583, 1e-05
        %v585 = vrsqrt.pop %v584
        %v586 = vmul.f32 %v585, %v584
        %v587 = vmul.f32 %v586, %v585
        %v588 = vmul.f32 0.5, %v587
        %v589 = vsub.f32 1.5, %v588
        %v590 = vmul.f32 %v585, %v589
        %vm591 = vweird.f32 %v584
        %vm592 = vweird.f32 %v585
        %vm593 = vmor %vm591, %vm592
        %v594 = vsel %vm593, %v585, %v590
        %v595 = vmul.f32 %v582, %v594
        %v596 = vld [vmem:[%s12] sm:$0x1]
        %v597 = vld [vmem:[%s15] sm:$0x1]
        %v598 = vld [vmem:[#allocation3] sm:$0x1]
        %v599 = vld [vmem:[%s549] sm:$0xff]
        %v600 = vld [vmem:[%s549 + $0x8] sm:$0xff]
        %v601 = vld [vmem:[%s549 + $0x10] sm:$0xff]
        %v602 = vld [vmem:[%s549 + $0x18] sm:$0xff]
        %v603 = vld [vmem:[%s549 + $0x20] sm:$0xff]
        %v604 = vld [vmem:[%s549 + $0x28] sm:$0xff]
        %v605 = vld [vmem:[%s549 + $0x30] sm:$0xff]
        %v606 = vld [vmem:[%s549 + $0x38] sm:$0xff]
        %v607 = vld [vmem:[%s549 + $0x40] sm:$0xff]
        %v608 = vld [vmem:[%s549 + $0x48] sm:$0xff]
        %v609 = vld [vmem:[%s549 + $0x50] sm:$0xff]
        %v610 = vld [vmem:[%s549 + $0x58] sm:$0xff]
        %v611 = vld [vmem:[%s549 + $0x60] sm:$0xff]
        %v612 = vld [vmem:[%s549 + $0x68] sm:$0xff]
        %v613 = vld [vmem:[%s549 + $0x70] sm:$0xff]
        %v614 = vld [vmem:[%s549 + $0x78] sm:$0xff]
        %v615 = vld [vmem:[%s549 + $0x80] sm:$0xff]
        %v616 = vld [vmem:[%s549 + $0x88] sm:$0xff]
        %v617 = vld [vmem:[%s549 + $0x90] sm:$0xff]
        %v618 = vld [vmem:[%s549 + $0x98] sm:$0xff]
        %v619 = vld [vmem:[%s549 + $0xa0] sm:$0xff]
        %v620 = vld [vmem:[%s549 + $0xa8] sm:$0xff]
        %v621 = vld [vmem:[%s549 + $0xb0] sm:$0xff]
        %v622 = vld [vmem:[%s549 + $0xb8] sm:$0xff]
        %v623 = vld [vmem:[%s549 + $0xc0] sm:$0xff]
        %v624 = vld [vmem:[%s549 + $0xc8] sm:$0xff]
        %v625 = vld [vmem:[%s549 + $0xd0] sm:$0xff]
        %v626 = vld [vmem:[%s549 + $0xd8] sm:$0xff]
        %v627 = vld [vmem:[%s549 + $0xe0] sm:$0xff]
        %v628 = vld [vmem:[%s549 + $0xe8] sm:$0xff]
        %v629 = vld [vmem:[%s549 + $0xf0] sm:$0xff]
        %v630 = vld [vmem:[%s549 + $0xf8] sm:$0xff]
        %632 = vset.pattern.permute.xlu0 0
        %633 = vperm.xlu0 %632, %v551
        %v634 = vpop.permute.xlu0 %633
        %637 = vst [vmem:[#allocation1] ss:$2 sm:$0xff] %v550
        %v638 = vld.sshfl [vmem:[#allocation1] sm:$0xff pattern:$0x75316420]
        %v639 = vld.sshfl [vmem:[#allocation1 + $0x8] sm:$0xff pattern:$0x75316420]
        %642 = vmatpush.msra.mxu0 %v614
        %643 = vmatpush.msra.mxu0 %v613
        %644 = vmatpush.msra.mxu0 %v612
        %645 = vmatpush.msra.mxu0 %v611
        %646 = vmatpush.msra.mxu0 %v610
        %647 = vmatpush.msra.mxu0 %v609
        %648 = vmatpush.msra.mxu0 %v608
        %649 = vmatpush.msra.mxu0 %v607
        %650 = vmatpush.msra.mxu0 %v606
        %651 = vmatpush.msra.mxu0 %v605
        %652 = vmatpush.msra.mxu0 %v604
        %653 = vmatpush.msra.mxu0 %v603
        %654 = vmatpush.msra.mxu0 %v602
        %655 = vmatpush.msra.mxu0 %v601
        %656 = vmatpush.msra.mxu0 %v600
        %657 = vmatpush.msra.mxu0 %v599
        %658 = vmatmul.f32.gmra.mxu0 %v638
        %v659 = vpop.f32.mrf.mxu0
        %v660 = vadd.f32 %v634, %v659
        %661 = vdwg.mxu0
        %662 = vmatpush.msra.mxu0 %v630
        %663 = vmatpush.msra.mxu0 %v629
        %664 = vmatpush.msra.mxu0 %v628
        %665 = vmatpush.msra.mxu0 %v627
        %666 = vmatpush.msra.mxu0 %v626
        %667 = vmatpush.msra.mxu0 %v625
        %668 = vmatpush.msra.mxu0 %v624
        %669 = vmatpush.msra.mxu0 %v623
        %670 = vmatpush.msra.mxu0 %v622
        %671 = vmatpush.msra.mxu0 %v621
        %672 = vmatpush.msra.mxu0 %v620
        %673 = vmatpush.msra.mxu0 %v619
        %674 = vmatpush.msra.mxu0 %v618
        %675 = vmatpush.msra.mxu0 %v617
        %676 = vmatpush.msra.mxu0 %v616
        %677 = vmatpush.msra.mxu0 %v615
        %678 = vmatmul.f32.gmra.mxu0 %v639
        %v679 = vpop.f32.mrf.mxu0
        %v680 = vadd.f32 %v660, %v679
        %681 = vdwg.mxu0
        %v683 = vperm.slane %v571, 0
        %vm685 = vcmask 523264
        %v687 = vsel %vm685, %v680, 0
        %689 = vmatpush.msra.mxu0 0.0
        %690 = vmatpush.msra.mxu0 0.0
        %691 = vmatpush.msra.mxu0 0.0
        %692 = vmatpush.msra.mxu0 0.0
        %693 = vmatpush.msra.mxu0 0.0
        %694 = vmatpush.msra.mxu0 0.0
        %695 = vmatpush.msra.mxu0 0.0
        %696 = vmatpush.msra.mxu0 0.0
        %697 = vmatpush.msra.mxu0 %v570
        %698 = vmatpush.msra.mxu0 %v569
        %699 = vmatpush.msra.mxu0 %v568
        %700 = vmatpush.msra.mxu0 %v567
        %701 = vmatpush.msra.mxu0 %v566
        %702 = vmatpush.msra.mxu0 %v565
        %703 = vmatpush.msra.mxu0 %v564
        %704 = vmatpush.msra.mxu0 %v563
        %705 = vmatmul.f32.gmra.mxu0 %v687
        %v706 = vpop.f32.mrf.mxu0
        %v707 = vadd.f32 %v683, %v706
        %708 = vdwg.mxu0
        %v710 = vperm.slane %v580, 0
        %712 = vmatpush.msra.mxu0 0.0
        %713 = vmatpush.msra.mxu0 0.0
        %714 = vmatpush.msra.mxu0 0.0
        %715 = vmatpush.msra.mxu0 0.0
        %716 = vmatpush.msra.mxu0 0.0
        %717 = vmatpush.msra.mxu0 0.0
        %718 = vmatpush.msra.mxu0 0.0
        %719 = vmatpush.msra.mxu0 0.0
        %720 = vmatpush.msra.mxu0 %v579
        %721 = vmatpush.msra.mxu0 %v578
        %722 = vmatpush.msra.mxu0 %v577
        %723 = vmatpush.msra.mxu0 %v576
        %724 = vmatpush.msra.mxu0 %v575
        %725 = vmatpush.msra.mxu0 %v574
        %726 = vmatpush.msra.mxu0 %v573
        %727 = vmatpush.msra.mxu0 %v572
        %728 = vmatmul.f32.gmra.mxu0 %v687
        %v729 = vpop.f32.mrf.mxu0
        %v730 = vadd.f32 %v710, %v729
        %731 = vdwg.mxu0
        %vm732 = vcmask 125952
        %v733 = vsel %vm732, %v707, 0.0
        %734 = vadd.xlane.f32.xlu0 %v733
        %v735 = vpop.xlane.xlu0 %734
        %v736 = vrcp.pop 16.0
        %v737 = vmul.f32 16.0, %v736
        %v738 = vsub.f32 1.0, %v737
        %v739 = vmul.f32 %v736, %v738
        %v740 = vadd.f32 %v736, %v739
        %vm741 = vweird.f32 %v736
        %v742 = vsel %vm741, %v736, %v740
        %v743 = vmul.f32 %v735, %v742
        %v744 = vsel %vm732, %v730, 0.0
        %745 = vadd.xlane.f32.xlu0 %v744
        %v746 = vpop.xlane.xlu0 %745
        %v747 = vmul.f32 %v746, %v742
        %748 = vxpose.xlu0.b32.start [1/16] %v743, 128
        %749 = vxpose.xlu0.b32.cont [2/16] 0.0, 128
        %750 = vxpose.xlu0.b32.cont [3/16] 0.0, 128
        %751 = vxpose.xlu0.b32.cont [4/16] 0.0, 128
        %752 = vxpose.xlu0.b32.cont [5/16] 0.0, 128
        %753 = vxpose.xlu0.b32.cont [6/16] 0.0, 128
        %754 = vxpose.xlu0.b32.cont [7/16] 0.0, 128
        %755 = vxpose.xlu0.b32.cont [8/16] 0.0, 128
        %756 = vxpose.xlu0.b32.cont [9/16] 0.0, 128
        %757 = vxpose.xlu0.b32.cont [10/16] 0.0, 128
        %758 = vxpose.xlu0.b32.cont [11/16] 0.0, 128
        %759 = vxpose.xlu0.b32.cont [12/16] 0.0, 128
        %760 = vxpose.xlu0.b32.cont [13/16] 0.0, 128
        %761 = vxpose.xlu0.b32.cont [14/16] 0.0, 128
        %762 = vxpose.xlu0.b32.cont [15/16] 0.0, 128
        %763 = vxpose.xlu0.b32.end [16/16] 0.0, 128
        %v764 = vpop.trf.xlu0
        %v765 = vpop.trf.xlu0
        %v766 = vpop.trf.xlu0
        %v767 = vpop.trf.xlu0
        %v768 = vpop.trf.xlu0
        %v769 = vpop.trf.xlu0
        %v770 = vpop.trf.xlu0
        %v771 = vpop.trf.xlu0
        %v772 = vpop.trf.xlu0
        %v773 = vpop.trf.xlu0
        %v774 = vpop.trf.xlu0
        %v775 = vpop.trf.xlu0
        %v776 = vpop.trf.xlu0
        %v777 = vpop.trf.xlu0
        %v778 = vpop.trf.xlu0
        %v779 = vpop.trf.xlu0
        %v780 = vperm.slane %v764, 0
        %v781 = vsub.f32 %v780, %v747
        %v782 = vtanh.pop %v781
        %v784 = vperm.slane %v553, 0
        %785 = vset.pattern.permute.xlu0 0
        %786 = vperm.xlu0 %785, %v784
        %v787 = vpop.permute.xlu0 %786
        %v789 = vmul.f32 %v782, %v787
        %v790 = vadd.f32 %v552, %v789
        %v792 = vperm.slane %v562, 0
        %794 = vmatpush.msra.mxu0 0.0
        %795 = vmatpush.msra.mxu0 0.0
        %796 = vmatpush.msra.mxu0 0.0
        %797 = vmatpush.msra.mxu0 0.0
        %798 = vmatpush.msra.mxu0 0.0
        %799 = vmatpush.msra.mxu0 0.0
        %800 = vmatpush.msra.mxu0 0.0
        %801 = vmatpush.msra.mxu0 0.0
        %802 = vmatpush.msra.mxu0 %v561
        %803 = vmatpush.msra.mxu0 %v560
        %804 = vmatpush.msra.mxu0 %v559
        %805 = vmatpush.msra.mxu0 %v558
        %806 = vmatpush.msra.mxu0 %v557
        %807 = vmatpush.msra.mxu0 %v556
        %808 = vmatpush.msra.mxu0 %v555
        %809 = vmatpush.msra.mxu0 %v554
        %810 = vmatmul.f32.gmra.mxu0 %v687
        %v811 = vpop.f32.mrf.mxu0
        %v812 = vadd.f32 %v792, %v811
        %813 = vdwg.mxu0
        %vm814 = vcmask 31744
        %v816 = vsel %vm814, %v790, 0
        %vm818 = vcmask 1043456
        %v820 = vsel %vm818, %v812, 0
        %822 = vmatpush.msra.mxu0 0.0
        %823 = vmatpush.msra.mxu0 0.0
        %824 = vmatpush.msra.mxu0 0.0
        %825 = vmatpush.msra.mxu0 0.0
        %826 = vmatpush.msra.mxu0 0.0
        %827 = vmatpush.msra.mxu0 0.0
        %828 = vmatpush.msra.mxu0 0.0
        %829 = vmatpush.msra.mxu0 0.0
        %830 = vmatpush.msra.mxu0 0.0
        %831 = vmatpush.msra.mxu0 0.0
        %832 = vmatpush.msra.mxu0 0.0
        %833 = vmatpush.msra.mxu0 0.0
        %834 = vmatpush.msra.mxu0 0.0
        %835 = vmatpush.msra.mxu0 0.0
        %836 = vmatpush.msra.mxu0 0.0
        %837 = vmatpush.msra.mxu0 %v820
        %838 = vmatmul.f32.gmra.mxu0 %v816
        %v839 = vpop.f32.mrf.mxu0
        %v840 = vadd.f32 0.0, %v839
        %841 = vdwg.mxu0
        %v843 = vperm.slane %v581, 0
        %v845 = vsub.f32 %v840, %v843
        %v847 = vperm.slane %v595, 0
        %v849 = vmul.f32 %v845, %v847
        %v851 = vperm.slane %v596, 0
        %v853 = vadd.f32 %v849, %v851
        %855 = vset.pattern.permute.xlu0 0
        %856 = vperm.xlu0 %855, %v598
        %v857 = vpop.permute.xlu0 %856
        %v859 = vperm.slane %v857, 0
        %v861 = vsel %vm814, %v597, 0
        %v864 = vsel %vm818, %v853, 0
        %866 = vmatpush.msra.mxu0 0.0
        %867 = vmatpush.msra.mxu0 0.0
        %868 = vmatpush.msra.mxu0 0.0
        %869 = vmatpush.msra.mxu0 0.0
        %870 = vmatpush.msra.mxu0 0.0
        %871 = vmatpush.msra.mxu0 0.0
        %872 = vmatpush.msra.mxu0 0.0
        %873 = vmatpush.msra.mxu0 0.0
        %874 = vmatpush.msra.mxu0 0.0
        %875 = vmatpush.msra.mxu0 0.0
        %876 = vmatpush.msra.mxu0 0.0
        %877 = vmatpush.msra.mxu0 0.0
        %878 = vmatpush.msra.mxu0 0.0
        %879 = vmatpush.msra.mxu0 0.0
        %880 = vmatpush.msra.mxu0 0.0
        %881 = vmatpush.msra.mxu0 %v864
        %882 = vmatmul.f32.gmra.mxu0 %v861
        %v883 = vpop.f32.mrf.mxu0
        %v884 = vadd.f32 %v859, %v883
        %885 = vdwg.mxu0
        %vm886 = vcmask 516096
        %887 = vst.msk [vmem:[%s544] sm:$0x1] %vm886, %v884
        %s888 = sand.u32 %s405, 1
        %s889 = scalar_lea.sflag [#allocation5], %s888
        %s890 = sand.u32 %s405, 1
        %s891 = scalar_lea.vmem [#allocation4], %s890
        // Predicated region
        $region89: #{tpu_custom_call.1} parent=87 // pred_check
          %p892 = pneg %p415
        $region90: #{tpu_custom_call.1} parent=87 // pred_check_branch
          %894 = sbr.rel (%p892) target = $region92
        $region91: #{tpu_custom_call.1} parent=87 // pred_region
          %896 = vsyncadd %s889, 0
          %s897 = scalar_lea.hbm %s17, %s35
          %s899 = sshll.u32 %s891, 4
          %s900 = int_to_ptr.vmem [resolvable:$true] %s899
          %s901 = sshll.u32 %s897, 4
          %s902 = int_to_ptr.hbm [resolvable:$true] %s901
          %904 = dma.vmem_to_hbm [thread:$0]  %s900, 16, %s902, %s889
        $region92: #{tpu_custom_call.1} parent=87 // pred_fallthru
          _
      $region88: #{tpu_custom_call.1} parent=5 // pred_fallthru
        _
      %p905 = scmp.le.s32.totalorder 2, %s30
      // Predicated region
      $region93: #{tpu_custom_call.1} parent=5 // pred_check
        %p906 = pneg %p905
      $region94: #{tpu_custom_call.1} parent=5 // pred_check_branch
        %908 = sbr.rel (%p906) target = $region96
      $region95: #{tpu_custom_call.1} parent=5 // pred_region
        %s909 = ssub.s32 %s30, 2
        // Predicated region
        $region97: #{tpu_custom_call.1} parent=95 // pred_check
          %p910 = pneg %p421
        $region98: #{tpu_custom_call.1} parent=95 // pred_check_branch
          %912 = sbr.rel (%p910) target = $region100
        $region99: #{tpu_custom_call.1} parent=95 // pred_region
          %s913 = sand.u32 %s406, 1
          %s914 = scalar_lea.sflag [#allocation5], %s913
          %s915 = sand.u32 %s406, 1
          %s916 = scalar_lea.vmem [#allocation4], %s915
          %918 = dma.done %s914, 16
        $region100: #{tpu_custom_call.1} parent=95 // pred_fallthru
          _
      $region96: #{tpu_custom_call.1} parent=5 // pred_fallthru
        _
    $region6: #{tpu_custom_call.1} parent=1 // loop_footer
      %s34 = sadd.s32 1, %s30
    $region7: #{tpu_custom_call.1} parent=1 // loop_footer_branch
      %29 = sbr.rel target = $region3
    $region8: #{tpu_custom_call.1} parent=1 // loop_exit
      _
    %919 = vsyncpa [#allocation5], 1
    %s920 = scalar_lea.sflag [#allocation5], 1
    %921 = vsyncpa %s920, 1

</llo_original>
